<compile_context>
chip_gen: v7x
topology: tpu7x:2x2x1
jax: 0.10.0
libtpu: 0.0.40
codegen_flags: <defaults>
</compile_context>

<pallas_src>
import jax
import jax.numpy as jnp
from jax.experimental import pallas as pl
from jax.experimental.pallas import tpu as pltpu


def last_pass(prev_outputs):
    """Exact LastPass.forward: return the last layer's output, zero-copy."""
    return prev_outputs[-1]


def _chunk_bounds(dim0, nbytes_total, *, max_inflight, min_chunk_bytes):
    """Split the leading dim into up to `max_inflight` contiguous chunks.

    Only chunk when each chunk stays >= min_chunk_bytes, so tiny tensors get
    a single DMA (no per-DMA overhead multiplication).
    """
    if dim0 <= 1 or nbytes_total < 2 * min_chunk_bytes:
        return ((0, dim0),)
    n = min(max_inflight, dim0, max(1, nbytes_total // min_chunk_bytes))
    base, rem = divmod(dim0, n)
    bounds, start = [], 0
    for i in range(n):
        sz = base + (1 if i < rem else 0)
        bounds.append((start, sz))
        start += sz
    return tuple(bounds)


def _make_hbm_copy_kernel(bounds):
    """Kernel: issue one HBM->HBM DMA per chunk (all in flight), then wait."""

    def kernel(x_hbm, o_hbm, sem):
        copies = []
        for i, (start, size) in enumerate(bounds):
            cp = pltpu.make_async_copy(
                x_hbm.at[pl.ds(start, size)],
                o_hbm.at[pl.ds(start, size)],
                sem.at[i],
            )
            cp.start()
            copies.append(cp)
        for cp in copies:
            cp.wait()

    return kernel


def _pallas_hbm_copy(x, *, max_inflight=4, min_chunk_bytes=1 << 20):
    nbytes = x.size * x.dtype.itemsize
    if x.ndim == 0 or x.size == 0:
        # Nothing worth DMA-ing; identity through a scheduling barrier.
        return jax.lax.optimization_barrier(x)

    bounds = _chunk_bounds(
        x.shape[0], nbytes,
        max_inflight=max_inflight, min_chunk_bytes=min_chunk_bytes,
    )
    return pl.pallas_call(
        _make_hbm_copy_kernel(bounds),
        out_shape=jax.ShapeDtypeStruct(x.shape, x.dtype),
        in_specs=[pl.BlockSpec(memory_space=pl.ANY)],
        out_specs=pl.BlockSpec(memory_space=pl.ANY),
        scratch_shapes=[pltpu.SemaphoreType.DMA((len(bounds),))],
        compiler_params=pltpu.CompilerParams(has_side_effects=True),
        cost_estimate=pl.CostEstimate(
            flops=0, transcendentals=0, bytes_accessed=2 * nbytes),
    )(x)


def last_pass_copy(prev_outputs, *, donate=False, max_inflight=4,
                   min_chunk_bytes=1 << 20):
    """LastPass.forward, optionally materialized as a fresh HBM buffer.

    donate=True: the caller's buffer is ours to keep — skip the kernel
    entirely (saves 2x bytes of HBM traffic) and only emit a scheduling
    barrier.  donate=False: produce a fresh buffer via direct HBM->HBM DMA.
    """
    x = prev_outputs[-1]
    if donate:
        return jax.lax.optimization_barrier(x)
    return _pallas_hbm_copy(x, max_inflight=max_inflight,
                            min_chunk_bytes=min_chunk_bytes)


if __name__ == "__main__":
    key = jax.random.PRNGKey(0)
    batch, seq, d_model = 2, 8, 32
    n_in = 3  # number of "previous layer outputs" in the list

    keys = jax.random.split(key, n_in)
    prev_outputs = [
        jax.random.normal(k, (batch, seq, d_model), dtype=jnp.float32)
        for k in keys
    ]

    # 1) Primary path: zero-copy identity — the actual LastPass semantics.
    out_fast = last_pass(prev_outputs)
    assert out_fast is prev_outputs[-1]

    # 2) Materialized pass-through via direct HBM->HBM DMA (single chunk).
    out = jax.block_until_ready(last_pass_copy(prev_outputs))
    assert out.shape == (batch, seq, d_model)
    assert out.dtype == prev_outputs[-1].dtype
    assert jnp.array_equal(out, prev_outputs[-1])

    # 3) Multiple in-flight DMA chunks (tiny min_chunk_bytes to force 4 chunks
    #    at small test size) under jit.
    xb = jax.random.normal(keys[0], (4, 8, 128), dtype=jnp.float32)
    f_multi = jax.jit(lambda t: last_pass_copy([t], min_chunk_bytes=4 * 1024))
    out_b = jax.block_until_ready(f_multi(xb))
    assert jnp.array_equal(out_b, xb)

    # 4) Element count not a multiple of 128 — no layout constraint for
    #    HBM->HBM DMA, so no special fallback path needed.
    xc = jax.random.normal(keys[1], (2, 3, 5), dtype=jnp.float32)
    out_c = jax.block_until_ready(last_pass_copy([xc]))
    assert jnp.array_equal(out_c, xc)

    # 5) Donated path: kernel skipped entirely (barrier only), under jit with
    #    an actually-donated buffer.
    xd = jax.random.normal(keys[2], (batch, seq, d_model), dtype=jnp.float32)
    f_don = jax.jit(lambda t: last_pass_copy([t], donate=True),
                    donate_argnums=0)
    out_d = jax.block_until_ready(f_don(xd + 0.0))
    assert out_d.shape == (batch, seq, d_model)
    assert jnp.array_equal(out_d, xd)

    print("KERNEL_OK")
</pallas_src>

<mosaic_0001>
module attributes {stable_mosaic.version = 11 : i64} {
  func.func @kernel(%arg0: memref<2x8x32xf32, #tpu.memory_space<any>>, %arg1: memref<2x8x32xf32, #tpu.memory_space<any>>, %arg2: memref<1x!tpu.dma_semaphore, #tpu.memory_space<semaphore_mem>>) attributes {dimension_semantics = [], scalar_prefetch = 0 : i64, scratch_operands = 1 : i64, tpu.core_type = #tpu.core_type<tc>} {
    %c0_i32 = arith.constant 0 : i32
    %c0_i32_0 = arith.constant 0 : i32
    %c0_i32_1 = arith.constant 0 : i32
    %c0_i32_2 = arith.constant 0 : i32
    %0 = tpu.memref_slice %arg0[%c0_i32_0, %c0_i32_1, %c0_i32_2] : memref<2x8x32xf32, #tpu.memory_space<any>> -> memref<2x8x32xf32, #tpu.memory_space<any>>
    %c0_i32_3 = arith.constant 0 : i32
    %c0_i32_4 = arith.constant 0 : i32
    %c0_i32_5 = arith.constant 0 : i32
    %1 = tpu.memref_slice %arg1[%c0_i32_3, %c0_i32_4, %c0_i32_5] : memref<2x8x32xf32, #tpu.memory_space<any>> -> memref<2x8x32xf32, #tpu.memory_space<any>>
    %2 = tpu.memref_slice %arg2[%c0_i32] : memref<1x!tpu.dma_semaphore, #tpu.memory_space<semaphore_mem>> -> memref<1x!tpu.dma_semaphore, #tpu.memory_space<semaphore_mem>>
    %3 = tpu.memref_squeeze %2 : memref<1x!tpu.dma_semaphore, #tpu.memory_space<semaphore_mem>> -> memref<!tpu.dma_semaphore, #tpu.memory_space<semaphore_mem>>
    tpu.enqueue_dma source(%0 : memref<2x8x32xf32, #tpu.memory_space<any>>) target(%1 : memref<2x8x32xf32, #tpu.memory_space<any>>) target_semaphore(%3 : memref<!tpu.dma_semaphore, #tpu.memory_space<semaphore_mem>>)
    %c0_i32_6 = arith.constant 0 : i32
    %c0_i32_7 = arith.constant 0 : i32
    %c0_i32_8 = arith.constant 0 : i32
    %c0_i32_9 = arith.constant 0 : i32
    %4 = tpu.memref_slice %arg0[%c0_i32_7, %c0_i32_8, %c0_i32_9] : memref<2x8x32xf32, #tpu.memory_space<any>> -> memref<2x8x32xf32, #tpu.memory_space<any>>
    %c0_i32_10 = arith.constant 0 : i32
    %c0_i32_11 = arith.constant 0 : i32
    %c0_i32_12 = arith.constant 0 : i32
    %5 = tpu.memref_slice %arg1[%c0_i32_10, %c0_i32_11, %c0_i32_12] : memref<2x8x32xf32, #tpu.memory_space<any>> -> memref<2x8x32xf32, #tpu.memory_space<any>>
    %6 = tpu.memref_slice %arg2[%c0_i32_6] : memref<1x!tpu.dma_semaphore, #tpu.memory_space<semaphore_mem>> -> memref<1x!tpu.dma_semaphore, #tpu.memory_space<semaphore_mem>>
    %7 = tpu.memref_squeeze %6 : memref<1x!tpu.dma_semaphore, #tpu.memory_space<semaphore_mem>> -> memref<!tpu.dma_semaphore, #tpu.memory_space<semaphore_mem>>
    tpu.wait_dma2 semaphore(%7 : memref<!tpu.dma_semaphore, #tpu.memory_space<semaphore_mem>>) src(%4 : memref<2x8x32xf32, #tpu.memory_space<any>>) dst(%5 : memref<2x8x32xf32, #tpu.memory_space<any>>)
    return
  }
}

</mosaic_0001>

<llo_original>
// kernel: tpu_custom_call.1
$region0: #{tpu_custom_call.1}
  #allocation0 [shape = 'u32[]', space=smem, size = 0x4, offset = 0x4, fixed_abs, tag = 'smem constant byte address 0x4 - core index']
  #allocation1 [shape = 'u32[144,128]{1,0:T(1,128)}', space=vmem, size = 0x12000, scoped, tag = 'internal scratch']
  #allocation2 [shape = 's32[1]{0}', space=sflag, size = 0x4, scoped, tag = 'scratch operand']
  #allocation3 [shape = 's32[]', space=sflag, size = 0x4, offset = 0, fixed_abs, tag = 'sflag constant byte address 0x0 - dummy sync flag']
  #allocation4 [shape = 'u32[0]{0}', space=smem, size = 0, offset = 0, fixed_abs, tag = 'smem constant byte address 0x0 - null']
  %s0 = inlined_call_operand.hbm [shape: f32[2,8,32], index: 0, kind: input, shape index: {}]
  %s1 = inlined_call_operand.hbm [shape: f32[2,8,32], index: 1, kind: output, shape index: {}]
  %s2 = sld [smem:[#allocation0]]
  $region2: #{tpu_custom_call.1} parent=0
    _
  %s4 = ssub.s32 1, %s2
  %s5 = scalar_select 0, %s4, %s2
  %s7 = sshll.u32 1, 14
  %s8 = sxor.u32 4294967295, %s7
  %s11 = sshll.u32 3, 24
  %s12 = sxor.u32 4294967295, %s11
  %s13 = sand.u32 0, %s12
  %s15 = sor.u32 %s13, 0
  %18 = dma.general %s0, 256, %s1, [#allocation2], [#allocation3], [#allocation4], %s15, 0
  %s19 = smul.u32 2, 8
  %s20 = smul.u32 %s19, 1
  %s21 = sshll.u32 %s20, 4
  %22 = dma.done [#allocation2], %s21
  %23 = vsyncmov [#allocation2]
  %s24 = vpop.sfrf %23
  %p25 = scmp.eq.s32.totalorder %s24, 0
  %p26 = pneg %p25
  %28 = shalt.err (%p26)

</llo_original>
